<compile_context>
chip_gen: v7x
topology: tpu7x:2x2x1
jax: 0.10.0
libtpu: 0.0.40
codegen_flags: <defaults>
</compile_context>

<pallas_src>
import functools

import jax
import jax.numpy as jnp
from jax.experimental import pallas as pl
from jax.experimental.pallas import tpu as pltpu

_LANE = 128
_SINGLE_BUFFER_OK = True   # flipped off if this JAX build rejects pl.Buffered(1)


def _round_up(n, m):
    return ((n + m - 1) // m) * m


def _round_down(n, m):
    return (n // m) * m


# ---------------------------------------------------------------------------
# Kernel
# ---------------------------------------------------------------------------
def _mlp_kernel(x_ref, w1_ref, b1_ref, w2_ref, b2_ref, w3_ref, b3_ref, out_ref):
    """Fused 3-layer MLP + (mu, sigma) head for one row tile (feature-major).

      x_ref   : (x_dim, tm)    f32, cast to compute dtype in-kernel
      wK_ref  : (out_f, in_f)  compute dtype (pre-transposed, VMEM-resident)
      bK_ref  : (out_f, 1)     f32
      out_ref : (2*y_dim, tm)  f32, rows [0, y_dim) = mu, [y_dim, 2*y_dim) = sigma
    """
    y2 = out_ref.shape[0]
    y_dim = y2 // 2
    cdt = w1_ref.dtype  # MXU compute dtype (bf16 or f32)

    # In-kernel cast (free VPU slot) instead of a wrapper-side XLA cast pass.
    x = x_ref[...].astype(cdt)                                        # (x_dim, tm)

    h = jnp.dot(w1_ref[...], x, preferred_element_type=jnp.float32) + b1_ref[...]
    h = jnp.maximum(h, 0.0)                                           # ReLU, f32

    h = jnp.dot(w2_ref[...], h.astype(cdt),
                preferred_element_type=jnp.float32) + b2_ref[...]
    h = jnp.maximum(h, 0.0)                                           # ReLU, f32

    out = jnp.dot(w3_ref[...], h.astype(cdt),
                  preferred_element_type=jnp.float32) + b3_ref[...]   # (y2, tm)

    # mu rows stay linear, sigma rows go through the softplus head.  Sublane
    # mask select (VPU) + softplus (EUP) replaces slice+concatenate, avoiding
    # XLU relayouts and extra VMEM temporaries; tile is written in one pass.
    row = jax.lax.broadcasted_iota(jnp.int32, out.shape, 0)
    sig = 0.1 + 0.9 * jax.nn.softplus(out)
    out_ref[...] = jnp.where(row < y_dim, out, sig).astype(out_ref.dtype)


# ---------------------------------------------------------------------------
# VMEM / tiling helpers
# ---------------------------------------------------------------------------
def _vmem_cap_bytes():
    """Generation-aware cap: ~48 MiB on v7x (64 MiB/TC), ~96 MiB on v5e/v6e."""
    try:
        cap = int(pltpu.get_tpu_info().vmem_capacity_bytes)
    except Exception:      # conservative fallback if the query is unavailable
        cap = 64 << 20
    return max(16 << 20, (cap * 3) // 4)


def _weight_bytes(x_dim, z_dim, y2, compute_dtype):
    bpe = jnp.dtype(compute_dtype).itemsize
    sub = max(8, 32 // bpe)            # sublane granule: 8 (f32), 16 (bf16)
    padl = lambda n: _round_up(max(n, 1), _LANE)
    pads = lambda n: _round_up(max(n, 1), sub)
    w = (pads(z_dim) * padl(x_dim) + pads(z_dim) * padl(z_dim)
         + pads(y2) * padl(z_dim)) * bpe
    b = (2 * _round_up(z_dim, 8) + _round_up(y2, 8)) * _LANE * 4      # f32 biases
    return w + b


def _vmem_budget_bytes(tm, x_dim, z_dim, y2, compute_dtype, single_buffer):
    x_tile = _round_up(x_dim, 8) * tm * 4          # streamed f32 input tile
    o_tile = _round_up(y2, 8) * tm * 4             # streamed f32 output tile
    h_live = 2 * _round_up(z_dim, 8) * tm * 4      # f32 intermediates / spill room
    wbuf = 1 if single_buffer else 2
    need = (2 * (x_tile + o_tile) + h_live
            + wbuf * _weight_bytes(x_dim, z_dim, y2, compute_dtype))
    budget = 2 * need + (8 << 20)                  # margin for compiler scratch
    return int(min(max(budget, 16 << 20), _vmem_cap_bytes()))


def _default_row_tile():
    # Bigger tiles amortize the ~0.35us per-grid-step overhead; the streamed
    # per-row cost is tiny.  v7x (smaller VMEM) gets a smaller default.
    return 1024 if _vmem_cap_bytes() <= (56 << 20) else 2048


def _choose_row_tile(rows, tm_req):
    """Row tile: multiple of 128 lanes, >=2 grid steps when there is enough
    work (v7x dual TensorCore), padding waste bounded to ~12.5%."""
    padded_min = _round_up(max(rows, 1), _LANE)
    tm = min(_round_up(tm_req, _LANE), padded_min)
    tm = max(_LANE, _round_down(tm, _LANE))
    if padded_min >= 2 * _LANE:                    # keep grid_m >= 2 when possible
        tm = min(tm, max(_LANE, _round_down(padded_min // 2, _LANE)))
    while tm > _LANE and (_round_up(rows, tm) - rows) * 8 > rows:
        tm = max(_LANE, _round_down(tm // 2, _LANE))
    padded_rows = _round_up(rows, tm)
    return tm, padded_rows, padded_rows // tm


def _const_spec(shape, single_buffer):
    """Grid-invariant (VMEM-resident) operand.  pl.Buffered(1) disables the
    default double-buffering of constant blocks (halves weight VMEM)."""
    if single_buffer:
        try:
            return pl.BlockSpec(shape, lambda i: (0, 0),
                                pipeline_mode=pl.Buffered(1))
        except Exception:      # API without pipeline_mode: default buffering
            pass
    return pl.BlockSpec(shape, lambda i: (0, 0))


# ---------------------------------------------------------------------------
# Forward pass
# ---------------------------------------------------------------------------
@functools.partial(
    jax.jit,
    static_argnames=("tm_eff", "grid_m", "padded_rows", "single_buffer"))
def _forward_impl(target_x, params_t, *, tm_eff, grid_m, padded_rows,
                  single_buffer):
    w1t, b1c, w2t, b2c, w3t, b3c = params_t
    B, T, x_dim = target_x.shape
    rows = B * T
    z_dim = w1t.shape[0]
    y2 = w3t.shape[0]
    y_dim = y2 // 2

    # Layout plumbing (fuses under jit): present a lane-dense feature-major
    # slab (x_dim, padded_rows).  x stays f32; the bf16 cast happens in-kernel.
    xt = target_x.reshape(rows, x_dim).T
    if padded_rows != rows:
        xt = jnp.pad(xt, ((0, 0), (0, padded_rows - rows)))

    stream_spec = lambda nf: pl.BlockSpec((nf, tm_eff), lambda i: (0, i))

    out = pl.pallas_call(
        _mlp_kernel,
        # Output stays f32; switch to bf16 here if the consumer tolerates it
        # (halves writeback bytes in this mem-bound kernel).
        out_shape=jax.ShapeDtypeStruct((y2, padded_rows), jnp.float32),
        grid_spec=pltpu.PrefetchScalarGridSpec(
            num_scalar_prefetch=0,
            grid=(grid_m,),
            in_specs=[
                stream_spec(x_dim),                          # x tile (streamed)
                _const_spec((z_dim, x_dim), single_buffer),  # w1^T (resident)
                _const_spec((z_dim, 1), single_buffer),      # b1
                _const_spec((z_dim, z_dim), single_buffer),  # w2^T
                _const_spec((z_dim, 1), single_buffer),      # b2
                _const_spec((y2, z_dim), single_buffer),     # w3^T
                _const_spec((y2, 1), single_buffer),         # b3
            ],
            out_specs=stream_spec(y2),                       # [mu ; sigma], lane-dense
        ),
        compiler_params=pltpu.CompilerParams(
            dimension_semantics=("parallel",),
            vmem_limit_bytes=_vmem_budget_bytes(
                tm_eff, x_dim, z_dim, y2, w1t.dtype, single_buffer),
        ),
    )(xt, w1t, b1c, w2t, b2c, w3t, b3c)

    out = out[:, :rows]                                      # drop row padding
    mu = out[:y_dim, :].T.reshape(B, T, y_dim)
    sigma = out[y_dim:, :].T.reshape(B, T, y_dim)
    return mu, sigma


def prepare_params(params, compute_dtype=jnp.bfloat16):
    """One-time conversion of (w1,b1,w2,b2,w3,b3) into the kernel layout.

    Weights are stored transposed (out_features, in_features) in the MXU
    compute dtype; biases stay f32 as (out_features, 1) columns.  Doing this
    once avoids per-call weight casts/copies.
    """
    w1, b1, w2, b2, w3, b3 = params
    c = compute_dtype
    return (jnp.asarray(w1.T, c), jnp.asarray(b1.reshape(-1, 1), jnp.float32),
            jnp.asarray(w2.T, c), jnp.asarray(b2.reshape(-1, 1), jnp.float32),
            jnp.asarray(w3.T, c), jnp.asarray(b3.reshape(-1, 1), jnp.float32))


def feedforward_mlp_forward(target_x, prepared_params, tm=None):
    """Pallas equivalent of FeedforwardMLP.forward((_, _, target_x)) in eval
    mode.  Returns (mu, sigma), each (batch, target_size, y_dim).  Eval-mode
    log_prob / kld / loss are None (training-only scalars, computed outside)."""
    global _SINGLE_BUFFER_OK
    B, T, x_dim = target_x.shape
    w1t, _, _, _, w3t, _ = prepared_params
    z_dim, y2 = w1t.shape[0], w3t.shape[0]
    rows = B * T

    if tm is None:
        tm = _default_row_tile()
    tm_eff, padded_rows, grid_m = _choose_row_tile(rows, tm)

    # Guard: the fused design keeps all three weights VMEM-resident.
    if 2 * _weight_bytes(x_dim, z_dim, y2, w1t.dtype) > _vmem_cap_bytes():
        # TODO(synk): add a z_dim (K/N) tiling grid axis once resident weights
        # no longer fit in VMEM (hits v7x's 64 MiB per-TC VMEM first).
        raise ValueError("z_dim too large for the VMEM-resident fused kernel")

    kwargs = dict(tm_eff=tm_eff, grid_m=grid_m, padded_rows=padded_rows)
    if _SINGLE_BUFFER_OK:
        try:
            mu, sigma = _forward_impl(target_x, prepared_params,
                                      single_buffer=True, **kwargs)
            jax.block_until_ready((mu, sigma))
            return mu, sigma
        except Exception:
            _SINGLE_BUFFER_OK = False   # this build rejects pl.Buffered(1)
    return _forward_impl(target_x, prepared_params, single_buffer=False, **kwargs)


# ---------------------------------------------------------------------------
# Reference / demo
# ---------------------------------------------------------------------------
def init_params(key, x_dim, z_dim, y_dim):
    """Deterministic synthetic parameters (shapes from FeedforwardMLP.__init__)."""
    ks = jax.random.split(key, 6)

    def lin(kw, kb, fan_in, fan_out):
        bound = 1.0 / jnp.sqrt(fan_in)
        w = jax.random.uniform(kw, (fan_in, fan_out), jnp.float32, -bound, bound)
        b = jax.random.uniform(kb, (fan_out,), jnp.float32, -bound, bound)
        return w, b

    w1, b1 = lin(ks[0], ks[1], x_dim, z_dim)
    w2, b2 = lin(ks[2], ks[3], z_dim, z_dim)
    w3, b3 = lin(ks[4], ks[5], z_dim, 2 * y_dim)
    return (w1, b1, w2, b2, w3, b3)


def _reference(target_x, params):
    """Pure-JAX f32 reference for correctness check."""
    w1, b1, w2, b2, w3, b3 = params
    h = jnp.maximum(target_x @ w1 + b1, 0.0)
    h = jnp.maximum(h @ w2 + b2, 0.0)
    out = h @ w3 + b3
    y_dim = w3.shape[1] // 2
    mu = out[..., :y_dim]
    sigma = 0.1 + 0.9 * jax.nn.softplus(out[..., y_dim:])
    return mu, sigma


if __name__ == "__main__":
    cfg = {"x_dim": 4, "z_dim": 32, "y_dim": 2}
    batch, target_size = 2, 8

    key = jax.random.PRNGKey(0)
    k_param, k_x, k_x2 = jax.random.split(key, 3)
    params = init_params(k_param, cfg["x_dim"], cfg["z_dim"], cfg["y_dim"])
    target_x = jax.random.normal(k_x, (batch, target_size, cfg["x_dim"]),
                                 dtype=jnp.float32)
    mu_ref, sigma_ref = _reference(target_x, params)

    # --- default path: bf16 MXU compute (weights prepared once), f32 head ---
    params_bf16 = prepare_params(params, jnp.bfloat16)
    mu, sigma = feedforward_mlp_forward(target_x, params_bf16)
    jax.block_until_ready((mu, sigma))
    assert mu.shape == (batch, target_size, cfg["y_dim"])
    assert sigma.shape == (batch, target_size, cfg["y_dim"])
    assert jnp.allclose(mu, mu_ref, atol=3e-2, rtol=3e-2)
    assert jnp.allclose(sigma, sigma_ref, atol=3e-2, rtol=3e-2)

    # --- f32 compute path: tight tolerance ---
    params_f32 = prepare_params(params, jnp.float32)
    mu32, sigma32 = feedforward_mlp_forward(target_x, params_f32)
    jax.block_until_ready((mu32, sigma32))
    assert jnp.allclose(mu32, mu_ref, atol=1e-5, rtol=1e-5)
    assert jnp.allclose(sigma32, sigma_ref, atol=1e-5, rtol=1e-5)

    # --- ragged row count (B*T not a multiple of the tile): padding path ---
    tx2 = jax.random.normal(k_x2, (3, 5, cfg["x_dim"]), dtype=jnp.float32)
    mu_r, sigma_r = feedforward_mlp_forward(tx2, params_f32)
    jax.block_until_ready((mu_r, sigma_r))
    mu_r_ref, sigma_r_ref = _reference(tx2, params)
    assert jnp.allclose(mu_r, mu_r_ref, atol=1e-5, rtol=1e-5)
    assert jnp.allclose(sigma_r, sigma_r_ref, atol=1e-5, rtol=1e-5)

    print("KERNEL_OK")
</pallas_src>

<mosaic_0001>
module attributes {stable_mosaic.version = 11 : i64} {
  func.func @_mlp_kernel(%arg0: i32, %arg1: memref<4x128xf32, #tpu.memory_space<vmem>>, %arg2: memref<32x4xbf16, #tpu.memory_space<vmem>>, %arg3: memref<32x1xf32, #tpu.memory_space<vmem>>, %arg4: memref<32x32xbf16, #tpu.memory_space<vmem>>, %arg5: memref<32x1xf32, #tpu.memory_space<vmem>>, %arg6: memref<4x32xbf16, #tpu.memory_space<vmem>>, %arg7: memref<4x1xf32, #tpu.memory_space<vmem>>, %arg8: memref<4x128xf32, #tpu.memory_space<vmem>>) attributes {dimension_semantics = [#tpu.dimension_semantics<parallel>], iteration_bounds = array<i64: 1>, scalar_prefetch = 0 : i64, scratch_operands = 0 : i64, tpu.core_type = #tpu.core_type<tc>, window_params = [{transform_indices = @transform_0, window_bounds = array<i64: 4, 128>}, {pipeline_mode = #tpu.pipeline_mode<synchronous>, transform_indices = @transform_1, window_bounds = array<i64: 32, 4>}, {pipeline_mode = #tpu.pipeline_mode<synchronous>, transform_indices = @transform_2, window_bounds = array<i64: 32, 1>}, {pipeline_mode = #tpu.pipeline_mode<synchronous>, transform_indices = @transform_3, window_bounds = array<i64: 32, 32>}, {pipeline_mode = #tpu.pipeline_mode<synchronous>, transform_indices = @transform_4, window_bounds = array<i64: 32, 1>}, {pipeline_mode = #tpu.pipeline_mode<synchronous>, transform_indices = @transform_5, window_bounds = array<i64: 4, 32>}, {pipeline_mode = #tpu.pipeline_mode<synchronous>, transform_indices = @transform_6, window_bounds = array<i64: 4, 1>}, {transform_indices = @transform_7, window_bounds = array<i64: 4, 128>}]} {
    %c0 = arith.constant 0 : index
    %c0_0 = arith.constant 0 : index
    %0 = vector.load %arg1[%c0, %c0_0] : memref<4x128xf32, #tpu.memory_space<vmem>>, vector<4x128xf32>
    %1 = arith.truncf %0 : vector<4x128xf32> to vector<4x128xbf16>
    %c0_1 = arith.constant 0 : index
    %c0_2 = arith.constant 0 : index
    %2 = vector.load %arg2[%c0_1, %c0_2] : memref<32x4xbf16, #tpu.memory_space<vmem>>, vector<32x4xbf16>
    %cst = arith.constant dense<0.000000e+00> : vector<32x128xf32>
    %3 = tpu.matmul %2, %1, %cst {dimension_numbers = #tpu.dot_dimension_numbers<[1], [0], [0], [1], [0, 0, 1, 1], [], []>} : vector<32x4xbf16>, vector<4x128xbf16>, vector<32x128xf32> -> vector<32x128xf32>
    %c0_3 = arith.constant 0 : index
    %c0_4 = arith.constant 0 : index
    %4 = vector.load %arg3[%c0_3, %c0_4] : memref<32x1xf32, #tpu.memory_space<vmem>>, vector<32x1xf32>
    %5 = vector.broadcast %4 : vector<32x1xf32> to vector<32x128xf32>
    %6 = arith.addf %3, %5 : vector<32x128xf32>
    %cst_5 = arith.constant 0.000000e+00 : f32
    %7 = vector.broadcast %cst_5 : f32 to vector<32x128xf32>
    %8 = arith.maximumf %6, %7 : vector<32x128xf32>
    %c0_6 = arith.constant 0 : index
    %c0_7 = arith.constant 0 : index
    %9 = vector.load %arg4[%c0_6, %c0_7] : memref<32x32xbf16, #tpu.memory_space<vmem>>, vector<32x32xbf16>
    %10 = arith.truncf %8 : vector<32x128xf32> to vector<32x128xbf16>
    %cst_8 = arith.constant dense<0.000000e+00> : vector<32x128xf32>
    %11 = tpu.matmul %9, %10, %cst_8 {dimension_numbers = #tpu.dot_dimension_numbers<[1], [0], [0], [1], [0, 0, 1, 1], [], []>} : vector<32x32xbf16>, vector<32x128xbf16>, vector<32x128xf32> -> vector<32x128xf32>
    %c0_9 = arith.constant 0 : index
    %c0_10 = arith.constant 0 : index
    %12 = vector.load %arg5[%c0_9, %c0_10] : memref<32x1xf32, #tpu.memory_space<vmem>>, vector<32x1xf32>
    %13 = vector.broadcast %12 : vector<32x1xf32> to vector<32x128xf32>
    %14 = arith.addf %11, %13 : vector<32x128xf32>
    %cst_11 = arith.constant 0.000000e+00 : f32
    %15 = vector.broadcast %cst_11 : f32 to vector<32x128xf32>
    %16 = arith.maximumf %14, %15 : vector<32x128xf32>
    %c0_12 = arith.constant 0 : index
    %c0_13 = arith.constant 0 : index
    %17 = vector.load %arg6[%c0_12, %c0_13] : memref<4x32xbf16, #tpu.memory_space<vmem>>, vector<4x32xbf16>
    %18 = arith.truncf %16 : vector<32x128xf32> to vector<32x128xbf16>
    %cst_14 = arith.constant dense<0.000000e+00> : vector<4x128xf32>
    %19 = tpu.matmul %17, %18, %cst_14 {dimension_numbers = #tpu.dot_dimension_numbers<[1], [0], [0], [1], [0, 0, 1, 1], [], []>} : vector<4x32xbf16>, vector<32x128xbf16>, vector<4x128xf32> -> vector<4x128xf32>
    %c0_15 = arith.constant 0 : index
    %c0_16 = arith.constant 0 : index
    %20 = vector.load %arg7[%c0_15, %c0_16] : memref<4x1xf32, #tpu.memory_space<vmem>>, vector<4x1xf32>
    %21 = vector.broadcast %20 : vector<4x1xf32> to vector<4x128xf32>
    %22 = arith.addf %19, %21 : vector<4x128xf32>
    %23 = tpu.iota {dimensions = array<i32: 0>} : vector<4x128xi32>
    %cst_17 = arith.constant 0.000000e+00 : f32
    %24 = vector.broadcast %cst_17 : f32 to vector<4x128xf32>
    %25 = arith.maximumf %22, %24 : vector<4x128xf32>
    %26 = vector.broadcast %cst_17 : f32 to vector<4x128xf32>
    %27 = arith.subf %22, %26 : vector<4x128xf32>
    %28 = arith.cmpf one, %27, %27 : vector<4x128xf32>
    %29 = vector.broadcast %cst_17 : f32 to vector<4x128xf32>
    %30 = arith.addf %22, %29 : vector<4x128xf32>
    %31 = math.absf %27 : vector<4x128xf32>
    %cst_18 = arith.constant 0.000000e+00 : f32
    %32 = vector.broadcast %cst_18 : f32 to vector<4x128xf32>
    %33 = arith.subf %32, %31 : vector<4x128xf32>
    %34 = math.exp %33 : vector<4x128xf32>
    %35 = math.log1p %34 : vector<4x128xf32>
    %36 = arith.addf %25, %35 : vector<4x128xf32>
    %37 = arith.select %28, %30, %36 : vector<4x128xi1>, vector<4x128xf32>
    %cst_19 = arith.constant 0.899999976 : f32
    %38 = vector.broadcast %cst_19 : f32 to vector<4x128xf32>
    %39 = arith.mulf %38, %37 : vector<4x128xf32>
    %cst_20 = arith.constant 1.000000e-01 : f32
    %40 = vector.broadcast %cst_20 : f32 to vector<4x128xf32>
    %41 = arith.addf %40, %39 : vector<4x128xf32>
    %c2_i32 = arith.constant 2 : i32
    %42 = vector.broadcast %c2_i32 : i32 to vector<4x128xi32>
    %43 = arith.cmpi slt, %23, %42 : vector<4x128xi32>
    %44 = arith.select %43, %22, %41 : vector<4x128xi1>, vector<4x128xf32>
    %c0_21 = arith.constant 0 : index
    %c0_22 = arith.constant 0 : index
    %45 = vector.load %arg8[%c0_21, %c0_22] : memref<4x128xf32, #tpu.memory_space<vmem>>, vector<4x128xf32>
    tpu.vector_store %arg8[%c0_21, %c0_22], %44 {strides = array<i32>} : memref<4x128xf32, #tpu.memory_space<vmem>>, vector<4x128xf32>,
    return
  }
  func.func @transform_0(%arg0: i32) -> (i32, i32) {
    %c0_i32 = arith.constant 0 : i32
    %c0_i32_0 = arith.constant 0 : i32
    return %c0_i32, %arg0 : i32, i32
  }
  func.func @transform_1(%arg0: i32) -> (i32, i32) {
    %c0_i32 = arith.constant 0 : i32
    %c0_i32_0 = arith.constant 0 : i32
    %c0_i32_1 = arith.constant 0 : i32
    return %c0_i32, %c0_i32_0 : i32, i32
  }
  func.func @transform_2(%arg0: i32) -> (i32, i32) {
    %c0_i32 = arith.constant 0 : i32
    %c0_i32_0 = arith.constant 0 : i32
    %c0_i32_1 = arith.constant 0 : i32
    return %c0_i32, %c0_i32_0 : i32, i32
  }
  func.func @transform_3(%arg0: i32) -> (i32, i32) {
    %c0_i32 = arith.constant 0 : i32
    %c0_i32_0 = arith.constant 0 : i32
    %c0_i32_1 = arith.constant 0 : i32
    return %c0_i32, %c0_i32_0 : i32, i32
  }
  func.func @transform_4(%arg0: i32) -> (i32, i32) {
    %c0_i32 = arith.constant 0 : i32
    %c0_i32_0 = arith.constant 0 : i32
    %c0_i32_1 = arith.constant 0 : i32
    return %c0_i32, %c0_i32_0 : i32, i32
  }
  func.func @transform_5(%arg0: i32) -> (i32, i32) {
    %c0_i32 = arith.constant 0 : i32
    %c0_i32_0 = arith.constant 0 : i32
    %c0_i32_1 = arith.constant 0 : i32
    return %c0_i32, %c0_i32_0 : i32, i32
  }
  func.func @transform_6(%arg0: i32) -> (i32, i32) {
    %c0_i32 = arith.constant 0 : i32
    %c0_i32_0 = arith.constant 0 : i32
    %c0_i32_1 = arith.constant 0 : i32
    return %c0_i32, %c0_i32_0 : i32, i32
  }
  func.func @transform_7(%arg0: i32) -> (i32, i32) {
    %c0_i32 = arith.constant 0 : i32
    %c0_i32_0 = arith.constant 0 : i32
    return %c0_i32, %arg0 : i32, i32
  }
}

module attributes {stable_mosaic.version = 11 : i64} {
  func.func @_mlp_kernel(%arg0: i32, %arg1: memref<4x128xf32, #tpu.memory_space<vmem>>, %arg2: memref<32x4xbf16, #tpu.memory_space<vmem>>, %arg3: memref<32x1xf32, #tpu.memory_space<vmem>>, %arg4: memref<32x32xbf16, #tpu.memory_space<vmem>>, %arg5: memref<32x1xf32, #tpu.memory_space<vmem>>, %arg6: memref<4x32xbf16, #tpu.memory_space<vmem>>, %arg7: memref<4x1xf32, #tpu.memory_space<vmem>>, %arg8: memref<4x128xf32, #tpu.memory_space<vmem>>) attributes {dimension_semantics = [#tpu.dimension_semantics<parallel>], iteration_bounds = array<i64: 1>, scalar_prefetch = 0 : i64, scratch_operands = 0 : i64, tpu.core_type = #tpu.core_type<tc>, window_params = [{transform_indices = @transform_0, window_bounds = array<i64: 4, 128>}, {pipeline_mode = #tpu.pipeline_mode<synchronous>, transform_indices = @transform_1, window_bounds = array<i64: 32, 4>}, {pipeline_mode = #tpu.pipeline_mode<synchronous>, transform_indices = @transform_2, window_bounds = array<i64: 32, 1>}, {pipeline_mode = #tpu.pipeline_mode<synchronous>, transform_indices = @transform_3, window_bounds = array<i64: 32, 32>}, {pipeline_mode = #tpu.pipeline_mode<synchronous>, transform_indices = @transform_4, window_bounds = array<i64: 32, 1>}, {pipeline_mode = #tpu.pipeline_mode<synchronous>, transform_indices = @transform_5, window_bounds = array<i64: 4, 32>}, {pipeline_mode = #tpu.pipeline_mode<synchronous>, transform_indices = @transform_6, window_bounds = array<i64: 4, 1>}, {transform_indices = @transform_7, window_bounds = array<i64: 4, 128>}]} {
    %c0 = arith.constant 0 : index
    %c0_0 = arith.constant 0 : index
    %0 = vector.load %arg1[%c0, %c0_0] : memref<4x128xf32, #tpu.memory_space<vmem>>, vector<4x128xf32>
    %1 = arith.truncf %0 : vector<4x128xf32> to vector<4x128xbf16>
    %c0_1 = arith.constant 0 : index
    %c0_2 = arith.constant 0 : index
    %2 = vector.load %arg2[%c0_1, %c0_2] : memref<32x4xbf16, #tpu.memory_space<vmem>>, vector<32x4xbf16>
    %cst = arith.constant dense<0.000000e+00> : vector<32x128xf32>
    %3 = tpu.matmul %2, %1, %cst {dimension_numbers = #tpu.dot_dimension_numbers<[1], [0], [0], [1], [0, 0, 1, 1], [], []>} : vector<32x4xbf16>, vector<4x128xbf16>, vector<32x128xf32> -> vector<32x128xf32>
    %c0_3 = arith.constant 0 : index
    %c0_4 = arith.constant 0 : index
    %4 = vector.load %arg3[%c0_3, %c0_4] : memref<32x1xf32, #tpu.memory_space<vmem>>, vector<32x1xf32>
    %5 = vector.broadcast %4 : vector<32x1xf32> to vector<32x128xf32>
    %6 = arith.addf %3, %5 : vector<32x128xf32>
    %cst_5 = arith.constant 0.000000e+00 : f32
    %7 = vector.broadcast %cst_5 : f32 to vector<32x128xf32>
    %8 = arith.maximumf %6, %7 : vector<32x128xf32>
    %c0_6 = arith.constant 0 : index
    %c0_7 = arith.constant 0 : index
    %9 = vector.load %arg4[%c0_6, %c0_7] : memref<32x32xbf16, #tpu.memory_space<vmem>>, vector<32x32xbf16>
    %10 = arith.truncf %8 : vector<32x128xf32> to vector<32x128xbf16>
    %cst_8 = arith.constant dense<0.000000e+00> : vector<32x128xf32>
    %11 = tpu.matmul %9, %10, %cst_8 {dimension_numbers = #tpu.dot_dimension_numbers<[1], [0], [0], [1], [0, 0, 1, 1], [], []>} : vector<32x32xbf16>, vector<32x128xbf16>, vector<32x128xf32> -> vector<32x128xf32>
    %c0_9 = arith.constant 0 : index
    %c0_10 = arith.constant 0 : index
    %12 = vector.load %arg5[%c0_9, %c0_10] : memref<32x1xf32, #tpu.memory_space<vmem>>, vector<32x1xf32>
    %13 = vector.broadcast %12 : vector<32x1xf32> to vector<32x128xf32>
    %14 = arith.addf %11, %13 : vector<32x128xf32>
    %cst_11 = arith.constant 0.000000e+00 : f32
    %15 = vector.broadcast %cst_11 : f32 to vector<32x128xf32>
    %16 = arith.maximumf %14, %15 : vector<32x128xf32>
    %c0_12 = arith.constant 0 : index
    %c0_13 = arith.constant 0 : index
    %17 = vector.load %arg6[%c0_12, %c0_13] : memref<4x32xbf16, #tpu.memory_space<vmem>>, vector<4x32xbf16>
    %18 = arith.truncf %16 : vector<32x128xf32> to vector<32x128xbf16>
    %cst_14 = arith.constant dense<0.000000e+00> : vector<4x128xf32>
    %19 = tpu.matmul %17, %18, %cst_14 {dimension_numbers = #tpu.dot_dimension_numbers<[1], [0], [0], [1], [0, 0, 1, 1], [], []>} : vector<4x32xbf16>, vector<32x128xbf16>, vector<4x128xf32> -> vector<4x128xf32>
    %c0_15 = arith.constant 0 : index
    %c0_16 = arith.constant 0 : index
    %20 = vector.load %arg7[%c0_15, %c0_16] : memref<4x1xf32, #tpu.memory_space<vmem>>, vector<4x1xf32>
    %21 = vector.broadcast %20 : vector<4x1xf32> to vector<4x128xf32>
    %22 = arith.addf %19, %21 : vector<4x128xf32>
    %23 = tpu.iota {dimensions = array<i32: 0>} : vector<4x128xi32>
    %cst_17 = arith.constant 0.000000e+00 : f32
    %24 = vector.broadcast %cst_17 : f32 to vector<4x128xf32>
    %25 = arith.maximumf %22, %24 : vector<4x128xf32>
    %26 = vector.broadcast %cst_17 : f32 to vector<4x128xf32>
    %27 = arith.subf %22, %26 : vector<4x128xf32>
    %28 = arith.cmpf one, %27, %27 : vector<4x128xf32>
    %29 = vector.broadcast %cst_17 : f32 to vector<4x128xf32>
    %30 = arith.addf %22, %29 : vector<4x128xf32>
    %31 = math.absf %27 : vector<4x128xf32>
    %cst_18 = arith.constant 0.000000e+00 : f32
    %32 = vector.broadcast %cst_18 : f32 to vector<4x128xf32>
    %33 = arith.subf %32, %31 : vector<4x128xf32>
    %34 = math.exp %33 : vector<4x128xf32>
    %35 = math.log1p %34 : vector<4x128xf32>
    %36 = arith.addf %25, %35 : vector<4x128xf32>
    %37 = arith.select %28, %30, %36 : vector<4x128xi1>, vector<4x128xf32>
    %cst_19 = arith.constant 0.899999976 : f32
    %38 = vector.broadcast %cst_19 : f32 to vector<4x128xf32>
    %39 = arith.mulf %38, %37 : vector<4x128xf32>
    %cst_20 = arith.constant 1.000000e-01 : f32
    %40 = vector.broadcast %cst_20 : f32 to vector<4x128xf32>
    %41 = arith.addf %40, %39 : vector<4x128xf32>
    %c2_i32 = arith.constant 2 : i32
    %42 = vector.broadcast %c2_i32 : i32 to vector<4x128xi32>
    %43 = arith.cmpi slt, %23, %42 : vector<4x128xi32>
    %44 = arith.select %43, %22, %41 : vector<4x128xi1>, vector<4x128xf32>
    %c0_21 = arith.constant 0 : index
    %c0_22 = arith.constant 0 : index
    %45 = vector.load %arg8[%c0_21, %c0_22] : memref<4x128xf32, #tpu.memory_space<vmem>>, vector<4x128xf32>
    tpu.vector_store %arg8[%c0_21, %c0_22], %44 {strides = array<i32>} : memref<4x128xf32, #tpu.memory_space<vmem>>, vector<4x128xf32>,
    return
  }
  func.func @transform_0(%arg0: i32) -> (i32, i32) {
    %c0_i32 = arith.constant 0 : i32
    %c0_i32_0 = arith.constant 0 : i32
    return %c0_i32, %arg0 : i32, i32
  }
  func.func @transform_1(%arg0: i32) -> (i32, i32) {
    %c0_i32 = arith.constant 0 : i32
    %c0_i32_0 = arith.constant 0 : i32
    %c0_i32_1 = arith.constant 0 : i32
    return %c0_i32, %c0_i32_0 : i32, i32
  }
  func.func @transform_2(%arg0: i32) -> (i32, i32) {
    %c0_i32 = arith.constant 0 : i32
    %c0_i32_0 = arith.constant 0 : i32
    %c0_i32_1 = arith.constant 0 : i32
    return %c0_i32, %c0_i32_0 : i32, i32
  }
  func.func @transform_3(%arg0: i32) -> (i32, i32) {
    %c0_i32 = arith.constant 0 : i32
    %c0_i32_0 = arith.constant 0 : i32
    %c0_i32_1 = arith.constant 0 : i32
    return %c0_i32, %c0_i32_0 : i32, i32
  }
  func.func @transform_4(%arg0: i32) -> (i32, i32) {
    %c0_i32 = arith.constant 0 : i32
    %c0_i32_0 = arith.constant 0 : i32
    %c0_i32_1 = arith.constant 0 : i32
    return %c0_i32, %c0_i32_0 : i32, i32
  }
  func.func @transform_5(%arg0: i32) -> (i32, i32) {
    %c0_i32 = arith.constant 0 : i32
    %c0_i32_0 = arith.constant 0 : i32
    %c0_i32_1 = arith.constant 0 : i32
    return %c0_i32, %c0_i32_0 : i32, i32
  }
  func.func @transform_6(%arg0: i32) -> (i32, i32) {
    %c0_i32 = arith.constant 0 : i32
    %c0_i32_0 = arith.constant 0 : i32
    %c0_i32_1 = arith.constant 0 : i32
    return %c0_i32, %c0_i32_0 : i32, i32
  }
  func.func @transform_7(%arg0: i32) -> (i32, i32) {
    %c0_i32 = arith.constant 0 : i32
    %c0_i32_0 = arith.constant 0 : i32
    return %c0_i32, %arg0 : i32, i32
  }
}

</mosaic_0001>

<llo_original>
// kernel: _forward_impl.1
$region0: #{_forward_impl.1}
  #allocation0 [shape = 'u32[]', space=smem, size = 0x4, offset = 0x4, fixed_abs, tag = 'smem constant byte address 0x4 - core index']
  #allocation1 [shape = 'u32[144,128]{1,0:T(1,128)}', space=vmem, size = 0x12000, scoped, tag = 'internal scratch']
  %s0 = inlined_call_operand.vmem [shape: f32[4,128], index: 0, kind: input, shape index: {}]
  %s1 = inlined_call_operand.vmem [shape: bf16[32,4], index: 1, kind: input, shape index: {}]
  %s2 = inlined_call_operand.vmem [shape: f32[32,1], index: 2, kind: input, shape index: {}]
  %s3 = inlined_call_operand.vmem [shape: bf16[32,32], index: 3, kind: input, shape index: {}]
  %s4 = inlined_call_operand.vmem [shape: f32[32,1], index: 4, kind: input, shape index: {}]
  %s5 = inlined_call_operand.vmem [shape: bf16[4,32], index: 5, kind: input, shape index: {}]
  %s6 = inlined_call_operand.vmem [shape: f32[4,1], index: 6, kind: input, shape index: {}]
  %s7 = inlined_call_operand.vmem [shape: f32[4,128], index: 7, kind: output, shape index: {}]
  %s8 = sld [smem:[#allocation0]]
  $region38: #{_forward_impl.1} parent=0
    _
  %s10 = ssub.s32 1, %s8
  %s11 = scalar_select 0, %s10, %s8
  // Predicated region
  $region2: #{_forward_impl.1} parent=0 // pred_check
    _
  $region3: #{_forward_impl.1} parent=0 // pred_check_branch
    %13 = sbr.rel (0) target = $region5
  $region4: #{_forward_impl.1} parent=0 // pred_region
    _
  $region5: #{_forward_impl.1} parent=0 // pred_fallthru
    _
  // Predicated region
  $region6: #{_forward_impl.1} parent=0 // pred_check
    _
  $region7: #{_forward_impl.1} parent=0 // pred_check_branch
    %15 = sbr.rel (0) target = $region9
  $region8: #{_forward_impl.1} parent=0 // pred_region
    _
  $region9: #{_forward_impl.1} parent=0 // pred_fallthru
    _
  // Predicated region
  $region10: #{_forward_impl.1} parent=0 // pred_check
    _
  $region11: #{_forward_impl.1} parent=0 // pred_check_branch
    %17 = sbr.rel (0) target = $region13
  $region12: #{_forward_impl.1} parent=0 // pred_region
    _
  $region13: #{_forward_impl.1} parent=0 // pred_fallthru
    _
  // Predicated region
  $region14: #{_forward_impl.1} parent=0 // pred_check
    _
  $region15: #{_forward_impl.1} parent=0 // pred_check_branch
    %19 = sbr.rel (0) target = $region17
  $region16: #{_forward_impl.1} parent=0 // pred_region
    _
  $region17: #{_forward_impl.1} parent=0 // pred_fallthru
    _
  // Predicated region
  $region18: #{_forward_impl.1} parent=0 // pred_check
    _
  $region19: #{_forward_impl.1} parent=0 // pred_check_branch
    %21 = sbr.rel (0) target = $region21
  $region20: #{_forward_impl.1} parent=0 // pred_region
    _
  $region21: #{_forward_impl.1} parent=0 // pred_fallthru
    _
  // Predicated region
  $region22: #{_forward_impl.1} parent=0 // pred_check
    _
  $region23: #{_forward_impl.1} parent=0 // pred_check_branch
    %23 = sbr.rel (0) target = $region25
  $region24: #{_forward_impl.1} parent=0 // pred_region
    _
  $region25: #{_forward_impl.1} parent=0 // pred_fallthru
    _
  // Predicated region
  $region26: #{_forward_impl.1} parent=0 // pred_check
    _
  $region27: #{_forward_impl.1} parent=0 // pred_check_branch
    %25 = sbr.rel (0) target = $region29
  $region28: #{_forward_impl.1} parent=0 // pred_region
    _
  $region29: #{_forward_impl.1} parent=0 // pred_fallthru
    _
  %v27 = vld [vmem:[%s0] sm:$0xf]
  %v28 = vpack.c.bf16 %v27, %v27
  %v29 = vld [vmem:[%s1] sm:$0xf]
  %v30 = vld [vmem:[%s1 + $0x4] sm:$0xf]
  %v31 = vld [vmem:[%s1 + $0x8] sm:$0xf]
  %v32 = vld [vmem:[%s1 + $0xc] sm:$0xf]
  %v33 = vld [vmem:[%s2] sm:$0xff]
  %v34 = vld [vmem:[%s2 + $0x8] sm:$0xff]
  %v35 = vld [vmem:[%s2 + $0x10] sm:$0xff]
  %v36 = vld [vmem:[%s2 + $0x18] sm:$0xff]
  %38 = vset.pattern.permute.xlu0 0
  %39 = vperm.xlu0 %38, %v33
  %v40 = vpop.permute.xlu0 %39
  %43 = vset.pattern.permute.xlu0 0
  %44 = vperm.xlu0 %43, %v34
  %v45 = vpop.permute.xlu0 %44
  %48 = vset.pattern.permute.xlu0 0
  %49 = vperm.xlu0 %48, %v35
  %v50 = vpop.permute.xlu0 %49
  %53 = vset.pattern.permute.xlu0 0
  %54 = vperm.xlu0 %53, %v36
  %v55 = vpop.permute.xlu0 %54
  %v61 = vunpack.c.l.b16 %v29
  %v62 = vunpack.c.l.b16 %v30
  %v63 = vunpack.c.l.b16 %v31
  %v64 = vunpack.c.l.b16 %v32
  %v65 = vpack.c.b16 %v62, %v61
  %v66 = vpack.c.b16 %v64, %v63
  %vm67 = vcmask 31744
  %v69 = vsel %vm67, %v65, 0
  %v72 = vsel %vm67, %v66, 0
  %vm74 = vcmask 1041408
  %v76 = vsel %vm74, %v28, 0
  %78 = vmatprep.subr.bf16.mxu0 0
  %79 = vmatpush1.bf16.msra.mxu0 %v76
  %80 = vmatprep.subr.bf16.mxu0 0
  %81 = vmatpush1.bf16.msra.mxu0 0
  %82 = vmatprep.subr.bf16.mxu0 0
  %83 = vmatpush1.bf16.msra.mxu0 0
  %84 = vmatprep.subr.bf16.mxu0 0
  %85 = vmatpush1.bf16.msra.mxu0 0
  %86 = vmatprep.subr.bf16.mxu0 0
  %87 = vmatpush1.bf16.msra.mxu0 0
  %88 = vmatprep.subr.bf16.mxu0 0
  %89 = vmatpush1.bf16.msra.mxu0 0
  %90 = vmatprep.subr.bf16.mxu0 0
  %91 = vmatpush1.bf16.msra.mxu0 0
  %92 = vmatprep.subr.bf16.mxu0 0
  %93 = vmatpush1.bf16.msra.mxu0 0
  %94 = vmatprep.subr.bf16.mxu0 0
  %95 = vmatpush1.bf16.msra.mxu0 0
  %96 = vmatprep.subr.bf16.mxu0 0
  %97 = vmatpush1.bf16.msra.mxu0 0
  %98 = vmatprep.subr.bf16.mxu0 0
  %99 = vmatpush1.bf16.msra.mxu0 0
  %100 = vmatprep.subr.bf16.mxu0 0
  %101 = vmatpush1.bf16.msra.mxu0 0
  %102 = vmatprep.subr.bf16.mxu0 0
  %103 = vmatpush1.bf16.msra.mxu0 0
  %104 = vmatprep.subr.bf16.mxu0 0
  %105 = vmatpush1.bf16.msra.mxu0 0
  %106 = vmatprep.subr.bf16.mxu0 0
  %107 = vmatpush1.bf16.msra.mxu0 0
  %108 = vmatprep.subr.bf16.mxu0 0
  %109 = vmatpush1.bf16.msra.mxu0 0
  %110 = vmatprep.mubr.bf16.mxu0 0
  %111 = vmatmul.mubr.bf16.gmra.mrb[0].mxu0 %v69
  %v112 = vpop.f32.mrb[0].mxu0
  %v113 = vadd.f32 %v40, %v112
  %v114 = vpop.f32.mrb[0].mxu0
  %v115 = vpop.f32.mrb[0].mxu0
  %v116 = vadd.f32 %v45, %v115
  %v117 = vpop.f32.mrb[0].mxu0
  %118 = vmatprep.mubr.bf16.mxu0 0
  %119 = vmatmul.mubr.bf16.gmra.mrb[0].mxu0 %v72
  %v120 = vpop.f32.mrb[0].mxu0
  %v121 = vadd.f32 %v50, %v120
  %v122 = vpop.f32.mrb[0].mxu0
  %v123 = vpop.f32.mrb[0].mxu0
  %v124 = vadd.f32 %v55, %v123
  %v125 = vpop.f32.mrb[0].mxu0
  %126 = vdwg.mxu0
  %v127 = vmax.f32 %v113, 0.0
  %v128 = vmax.f32 %v116, 0.0
  %v129 = vmax.f32 %v121, 0.0
  %v130 = vmax.f32 %v124, 0.0
  %v131 = vld [vmem:[%s3] sm:$0xf]
  %v132 = vld [vmem:[%s3 + $0x4] sm:$0xf]
  %v133 = vld [vmem:[%s3 + $0x8] sm:$0xf]
  %v134 = vld [vmem:[%s3 + $0xc] sm:$0xf]
  %v135 = vpack.c.bf16 %v128, %v127
  %v136 = vpack.c.bf16 %v130, %v129
  %v137 = vld [vmem:[%s4] sm:$0xff]
  %v138 = vld [vmem:[%s4 + $0x8] sm:$0xff]
  %v139 = vld [vmem:[%s4 + $0x10] sm:$0xff]
  %v140 = vld [vmem:[%s4 + $0x18] sm:$0xff]
  %142 = vset.pattern.permute.xlu0 0
  %143 = vperm.xlu0 %142, %v137
  %v144 = vpop.permute.xlu0 %143
  %147 = vset.pattern.permute.xlu0 0
  %148 = vperm.xlu0 %147, %v138
  %v149 = vpop.permute.xlu0 %148
  %152 = vset.pattern.permute.xlu0 0
  %153 = vperm.xlu0 %152, %v139
  %v154 = vpop.permute.xlu0 %153
  %157 = vset.pattern.permute.xlu0 0
  %158 = vperm.xlu0 %157, %v140
  %v159 = vpop.permute.xlu0 %158
  %v165 = vunpack.c.l.b16 %v131
  %v166 = vunpack.c.l.b16 %v132
  %v167 = vunpack.c.l.b16 %v133
  %v168 = vunpack.c.l.b16 %v134
  %v169 = vpack.c.b16 %v166, %v165
  %v170 = vpack.c.b16 %v168, %v167
  %vm171 = vcmask 261120
  %v173 = vsel %vm171, %v169, 0
  %v176 = vsel %vm171, %v170, 0
  %178 = vmatprep.subr.bf16.mxu0 0
  %179 = vmatpush1.bf16.msra.mxu0 %v135
  %180 = vmatprep.subr.bf16.mxu0 0
  %181 = vmatpush1.bf16.msra.mxu0 %v136
  %182 = vmatprep.subr.bf16.mxu0 0
  %183 = vmatpush1.bf16.msra.mxu0 0
  %184 = vmatprep.subr.bf16.mxu0 0
  %185 = vmatpush1.bf16.msra.mxu0 0
  %186 = vmatprep.subr.bf16.mxu0 0
  %187 = vmatpush1.bf16.msra.mxu0 0
  %188 = vmatprep.subr.bf16.mxu0 0
  %189 = vmatpush1.bf16.msra.mxu0 0
  %190 = vmatprep.subr.bf16.mxu0 0
  %191 = vmatpush1.bf16.msra.mxu0 0
  %192 = vmatprep.subr.bf16.mxu0 0
  %193 = vmatpush1.bf16.msra.mxu0 0
  %194 = vmatprep.subr.bf16.mxu0 0
  %195 = vmatpush1.bf16.msra.mxu0 0
  %196 = vmatprep.subr.bf16.mxu0 0
  %197 = vmatpush1.bf16.msra.mxu0 0
  %198 = vmatprep.subr.bf16.mxu0 0
  %199 = vmatpush1.bf16.msra.mxu0 0
  %200 = vmatprep.subr.bf16.mxu0 0
  %201 = vmatpush1.bf16.msra.mxu0 0
  %202 = vmatprep.subr.bf16.mxu0 0
  %203 = vmatpush1.bf16.msra.mxu0 0
  %204 = vmatprep.subr.bf16.mxu0 0
  %205 = vmatpush1.bf16.msra.mxu0 0
  %206 = vmatprep.subr.bf16.mxu0 0
  %207 = vmatpush1.bf16.msra.mxu0 0
  %208 = vmatprep.subr.bf16.mxu0 0
  %209 = vmatpush1.bf16.msra.mxu0 0
  %210 = vmatprep.mubr.bf16.mxu0 0
  %211 = vmatmul.mubr.bf16.gmra.mrb[0].mxu0 %v173
  %v212 = vpop.f32.mrb[0].mxu0
  %v213 = vadd.f32 %v144, %v212
  %v214 = vpop.f32.mrb[0].mxu0
  %v215 = vpop.f32.mrb[0].mxu0
  %v216 = vadd.f32 %v149, %v215
  %v217 = vpop.f32.mrb[0].mxu0
  %218 = vmatprep.mubr.bf16.mxu0 0
  %219 = vmatmul.mubr.bf16.gmra.mrb[0].mxu0 %v176
  %v220 = vpop.f32.mrb[0].mxu0
  %v221 = vadd.f32 %v154, %v220
  %v222 = vpop.f32.mrb[0].mxu0
  %v223 = vpop.f32.mrb[0].mxu0
  %v224 = vadd.f32 %v159, %v223
  %v225 = vpop.f32.mrb[0].mxu0
  %226 = vdwg.mxu0
  %v227 = vmax.f32 %v213, 0.0
  %v228 = vmax.f32 %v216, 0.0
  %v229 = vmax.f32 %v221, 0.0
  %v230 = vmax.f32 %v224, 0.0
  %v231 = vld [vmem:[%s5] sm:$0x3]
  %v232 = vpack.c.bf16 %v228, %v227
  %v233 = vpack.c.bf16 %v230, %v229
  %v234 = vld [vmem:[%s6] sm:$0xf]
  %236 = vset.pattern.permute.xlu0 0
  %237 = vperm.xlu0 %236, %v234
  %v238 = vpop.permute.xlu0 %237
  %v241 = vsel %vm171, %v231, 0
  %243 = vmatprep.subr.bf16.mxu0 0
  %244 = vmatpush1.bf16.msra.mxu0 %v232
  %245 = vmatprep.subr.bf16.mxu0 0
  %246 = vmatpush1.bf16.msra.mxu0 %v233
  %247 = vmatprep.subr.bf16.mxu0 0
  %248 = vmatpush1.bf16.msra.mxu0 0
  %249 = vmatprep.subr.bf16.mxu0 0
  %250 = vmatpush1.bf16.msra.mxu0 0
  %251 = vmatprep.subr.bf16.mxu0 0
  %252 = vmatpush1.bf16.msra.mxu0 0
  %253 = vmatprep.subr.bf16.mxu0 0
  %254 = vmatpush1.bf16.msra.mxu0 0
  %255 = vmatprep.subr.bf16.mxu0 0
  %256 = vmatpush1.bf16.msra.mxu0 0
  %257 = vmatprep.subr.bf16.mxu0 0
  %258 = vmatpush1.bf16.msra.mxu0 0
  %259 = vmatprep.subr.bf16.mxu0 0
  %260 = vmatpush1.bf16.msra.mxu0 0
  %261 = vmatprep.subr.bf16.mxu0 0
  %262 = vmatpush1.bf16.msra.mxu0 0
  %263 = vmatprep.subr.bf16.mxu0 0
  %264 = vmatpush1.bf16.msra.mxu0 0
  %265 = vmatprep.subr.bf16.mxu0 0
  %266 = vmatpush1.bf16.msra.mxu0 0
  %267 = vmatprep.subr.bf16.mxu0 0
  %268 = vmatpush1.bf16.msra.mxu0 0
  %269 = vmatprep.subr.bf16.mxu0 0
  %270 = vmatpush1.bf16.msra.mxu0 0
  %271 = vmatprep.subr.bf16.mxu0 0
  %272 = vmatpush1.bf16.msra.mxu0 0
  %273 = vmatprep.subr.bf16.mxu0 0
  %274 = vmatpush1.bf16.msra.mxu0 0
  %275 = vmatprep.mubr.bf16.mxu0 0
  %276 = vmatmul.mubr.bf16.gmra.mrb[0].mxu0 %v241
  %v277 = vpop.f32.mrb[0].mxu0
  %v278 = vadd.f32 %v238, %v277
  %v279 = vpop.f32.mrb[0].mxu0
  %v280 = vpop.f32.mrb[0].mxu0
  %v281 = vpop.f32.mrb[0].mxu0
  %282 = vdwg.mxu0
  %v283 = vlaneseq
  %v284 = vshrl.u32 %v283, 7
  %v285 = vmax.f32 %v278, 0.0
  %vm286 = vcmp.ne.f32.partialorder %v278, %v278
  %v287 = vadd.f32 %v278, 0.0
  %v288 = vand.u32 2147483647, %v278
  %v289 = vsub.f32 0.0, %v288
  %v290 = vmul.f32 %v289, 1.442695
  %v291 = vpow.pop %v290
  %v292 = vadd.f32 %v291, 1.0
  %v293 = vlog2.pop %v292
  %v294 = vmul.f32 %v293, 0.6931472
  %v295 = vmul.f32 -0.5, %v291
  %v296 = vadd.f32 %v295, 1.0
  %v297 = vmul.f32 %v296, %v291
  %v298 = vand.u32 2147483647, %v291
  %vm299 = vcmp.lt.f32.partialorder %v298, 0.0004427343
  %v300 = vsel %vm299, %v297, %v294
  %v301 = vadd.f32 %v285, %v300
  %v302 = vsel %vm286, %v287, %v301
  %v303 = vmul.f32 %v302, 0.9
  %v304 = vadd.f32 %v303, 0.1
  %vm305 = vcmp.lt.s32.totalorder %v284, 2
  %v306 = vsel %vm305, %v278, %v304
  %307 = vst [vmem:[%s7] sm:$0xf] %v306
  // Predicated region
  $region30: #{_forward_impl.1} parent=0 // pred_check
    _
  $region31: #{_forward_impl.1} parent=0 // pred_check_branch
    %309 = sbr.rel (0) target = $region33
  $region32: #{_forward_impl.1} parent=0 // pred_region
    _
  $region33: #{_forward_impl.1} parent=0 // pred_fallthru
    _
  // Predicated region
  $region34: #{_forward_impl.1} parent=0 // pred_check
    _
  $region35: #{_forward_impl.1} parent=0 // pred_check_branch
    %311 = sbr.rel (0) target = $region37
  $region36: #{_forward_impl.1} parent=0 // pred_region
    _
  $region37: #{_forward_impl.1} parent=0 // pred_fallthru
    _

// kernel: _forward_impl.1
$region0: #{_forward_impl.1}
  #allocation0 [shape = 'u32[]', space=smem, size = 0x4, offset = 0x4, fixed_abs, tag = 'smem constant byte address 0x4 - core index']
  #allocation1 [shape = 'u32[144,128]{1,0:T(1,128)}', space=vmem, size = 0x12000, scoped, tag = 'internal scratch']
  %s0 = inlined_call_operand.vmem [shape: f32[4,128], index: 0, kind: input, shape index: {}]
  %s1 = inlined_call_operand.vmem [shape: bf16[32,4], index: 1, kind: input, shape index: {}]
  %s2 = inlined_call_operand.vmem [shape: f32[32,1], index: 2, kind: input, shape index: {}]
  %s3 = inlined_call_operand.vmem [shape: bf16[32,32], index: 3, kind: input, shape index: {}]
  %s4 = inlined_call_operand.vmem [shape: f32[32,1], index: 4, kind: input, shape index: {}]
  %s5 = inlined_call_operand.vmem [shape: bf16[4,32], index: 5, kind: input, shape index: {}]
  %s6 = inlined_call_operand.vmem [shape: f32[4,1], index: 6, kind: input, shape index: {}]
  %s7 = inlined_call_operand.vmem [shape: f32[4,128], index: 7, kind: output, shape index: {}]
  %s8 = sld [smem:[#allocation0]]
  $region38: #{_forward_impl.1} parent=0
    _
  %s10 = ssub.s32 1, %s8
  %s11 = scalar_select 0, %s10, %s8
  // Predicated region
  $region2: #{_forward_impl.1} parent=0 // pred_check
    _
  $region3: #{_forward_impl.1} parent=0 // pred_check_branch
    %13 = sbr.rel (0) target = $region5
  $region4: #{_forward_impl.1} parent=0 // pred_region
    _
  $region5: #{_forward_impl.1} parent=0 // pred_fallthru
    _
  // Predicated region
  $region6: #{_forward_impl.1} parent=0 // pred_check
    _
  $region7: #{_forward_impl.1} parent=0 // pred_check_branch
    %15 = sbr.rel (0) target = $region9
  $region8: #{_forward_impl.1} parent=0 // pred_region
    _
  $region9: #{_forward_impl.1} parent=0 // pred_fallthru
    _
  // Predicated region
  $region10: #{_forward_impl.1} parent=0 // pred_check
    _
  $region11: #{_forward_impl.1} parent=0 // pred_check_branch
    %17 = sbr.rel (0) target = $region13
  $region12: #{_forward_impl.1} parent=0 // pred_region
    _
  $region13: #{_forward_impl.1} parent=0 // pred_fallthru
    _
  // Predicated region
  $region14: #{_forward_impl.1} parent=0 // pred_check
    _
  $region15: #{_forward_impl.1} parent=0 // pred_check_branch
    %19 = sbr.rel (0) target = $region17
  $region16: #{_forward_impl.1} parent=0 // pred_region
    _
  $region17: #{_forward_impl.1} parent=0 // pred_fallthru
    _
  // Predicated region
  $region18: #{_forward_impl.1} parent=0 // pred_check
    _
  $region19: #{_forward_impl.1} parent=0 // pred_check_branch
    %21 = sbr.rel (0) target = $region21
  $region20: #{_forward_impl.1} parent=0 // pred_region
    _
  $region21: #{_forward_impl.1} parent=0 // pred_fallthru
    _
  // Predicated region
  $region22: #{_forward_impl.1} parent=0 // pred_check
    _
  $region23: #{_forward_impl.1} parent=0 // pred_check_branch
    %23 = sbr.rel (0) target = $region25
  $region24: #{_forward_impl.1} parent=0 // pred_region
    _
  $region25: #{_forward_impl.1} parent=0 // pred_fallthru
    _
  // Predicated region
  $region26: #{_forward_impl.1} parent=0 // pred_check
    _
  $region27: #{_forward_impl.1} parent=0 // pred_check_branch
    %25 = sbr.rel (0) target = $region29
  $region28: #{_forward_impl.1} parent=0 // pred_region
    _
  $region29: #{_forward_impl.1} parent=0 // pred_fallthru
    _
  %v27 = vld [vmem:[%s0] sm:$0xf]
  %v28 = vpack.c.bf16 %v27, %v27
  %v29 = vld [vmem:[%s1] sm:$0xf]
  %v30 = vld [vmem:[%s1 + $0x4] sm:$0xf]
  %v31 = vld [vmem:[%s1 + $0x8] sm:$0xf]
  %v32 = vld [vmem:[%s1 + $0xc] sm:$0xf]
  %v33 = vld [vmem:[%s2] sm:$0xff]
  %v34 = vld [vmem:[%s2 + $0x8] sm:$0xff]
  %v35 = vld [vmem:[%s2 + $0x10] sm:$0xff]
  %v36 = vld [vmem:[%s2 + $0x18] sm:$0xff]
  %38 = vset.pattern.permute.xlu0 0
  %39 = vperm.xlu0 %38, %v33
  %v40 = vpop.permute.xlu0 %39
  %43 = vset.pattern.permute.xlu0 0
  %44 = vperm.xlu0 %43, %v34
  %v45 = vpop.permute.xlu0 %44
  %48 = vset.pattern.permute.xlu0 0
  %49 = vperm.xlu0 %48, %v35
  %v50 = vpop.permute.xlu0 %49
  %53 = vset.pattern.permute.xlu0 0
  %54 = vperm.xlu0 %53, %v36
  %v55 = vpop.permute.xlu0 %54
  %v61 = vunpack.c.l.b16 %v29
  %v62 = vunpack.c.l.b16 %v30
  %v63 = vunpack.c.l.b16 %v31
  %v64 = vunpack.c.l.b16 %v32
  %v65 = vpack.c.b16 %v62, %v61
  %v66 = vpack.c.b16 %v64, %v63
  %vm67 = vcmask 31744
  %v69 = vsel %vm67, %v65, 0
  %v72 = vsel %vm67, %v66, 0
  %vm74 = vcmask 1041408
  %v76 = vsel %vm74, %v28, 0
  %78 = vmatprep.subr.bf16.mxu0 0
  %79 = vmatpush1.bf16.msra.mxu0 %v76
  %80 = vmatprep.subr.bf16.mxu0 0
  %81 = vmatpush1.bf16.msra.mxu0 0
  %82 = vmatprep.subr.bf16.mxu0 0
  %83 = vmatpush1.bf16.msra.mxu0 0
  %84 = vmatprep.subr.bf16.mxu0 0
  %85 = vmatpush1.bf16.msra.mxu0 0
  %86 = vmatprep.subr.bf16.mxu0 0
  %87 = vmatpush1.bf16.msra.mxu0 0
  %88 = vmatprep.subr.bf16.mxu0 0
  %89 = vmatpush1.bf16.msra.mxu0 0
  %90 = vmatprep.subr.bf16.mxu0 0
  %91 = vmatpush1.bf16.msra.mxu0 0
  %92 = vmatprep.subr.bf16.mxu0 0
  %93 = vmatpush1.bf16.msra.mxu0 0
  %94 = vmatprep.subr.bf16.mxu0 0
  %95 = vmatpush1.bf16.msra.mxu0 0
  %96 = vmatprep.subr.bf16.mxu0 0
  %97 = vmatpush1.bf16.msra.mxu0 0
  %98 = vmatprep.subr.bf16.mxu0 0
  %99 = vmatpush1.bf16.msra.mxu0 0
  %100 = vmatprep.subr.bf16.mxu0 0
  %101 = vmatpush1.bf16.msra.mxu0 0
  %102 = vmatprep.subr.bf16.mxu0 0
  %103 = vmatpush1.bf16.msra.mxu0 0
  %104 = vmatprep.subr.bf16.mxu0 0
  %105 = vmatpush1.bf16.msra.mxu0 0
  %106 = vmatprep.subr.bf16.mxu0 0
  %107 = vmatpush1.bf16.msra.mxu0 0
  %108 = vmatprep.subr.bf16.mxu0 0
  %109 = vmatpush1.bf16.msra.mxu0 0
  %110 = vmatprep.mubr.bf16.mxu0 0
  %111 = vmatmul.mubr.bf16.gmra.mrb[0].mxu0 %v69
  %v112 = vpop.f32.mrb[0].mxu0
  %v113 = vadd.f32 %v40, %v112
  %v114 = vpop.f32.mrb[0].mxu0
  %v115 = vpop.f32.mrb[0].mxu0
  %v116 = vadd.f32 %v45, %v115
  %v117 = vpop.f32.mrb[0].mxu0
  %118 = vmatprep.mubr.bf16.mxu0 0
  %119 = vmatmul.mubr.bf16.gmra.mrb[0].mxu0 %v72
  %v120 = vpop.f32.mrb[0].mxu0
  %v121 = vadd.f32 %v50, %v120
  %v122 = vpop.f32.mrb[0].mxu0
  %v123 = vpop.f32.mrb[0].mxu0
  %v124 = vadd.f32 %v55, %v123
  %v125 = vpop.f32.mrb[0].mxu0
  %126 = vdwg.mxu0
  %v127 = vmax.f32 %v113, 0.0
  %v128 = vmax.f32 %v116, 0.0
  %v129 = vmax.f32 %v121, 0.0
  %v130 = vmax.f32 %v124, 0.0
  %v131 = vld [vmem:[%s3] sm:$0xf]
  %v132 = vld [vmem:[%s3 + $0x4] sm:$0xf]
  %v133 = vld [vmem:[%s3 + $0x8] sm:$0xf]
  %v134 = vld [vmem:[%s3 + $0xc] sm:$0xf]
  %v135 = vpack.c.bf16 %v128, %v127
  %v136 = vpack.c.bf16 %v130, %v129
  %v137 = vld [vmem:[%s4] sm:$0xff]
  %v138 = vld [vmem:[%s4 + $0x8] sm:$0xff]
  %v139 = vld [vmem:[%s4 + $0x10] sm:$0xff]
  %v140 = vld [vmem:[%s4 + $0x18] sm:$0xff]
  %142 = vset.pattern.permute.xlu0 0
  %143 = vperm.xlu0 %142, %v137
  %v144 = vpop.permute.xlu0 %143
  %147 = vset.pattern.permute.xlu0 0
  %148 = vperm.xlu0 %147, %v138
  %v149 = vpop.permute.xlu0 %148
  %152 = vset.pattern.permute.xlu0 0
  %153 = vperm.xlu0 %152, %v139
  %v154 = vpop.permute.xlu0 %153
  %157 = vset.pattern.permute.xlu0 0
  %158 = vperm.xlu0 %157, %v140
  %v159 = vpop.permute.xlu0 %158
  %v165 = vunpack.c.l.b16 %v131
  %v166 = vunpack.c.l.b16 %v132
  %v167 = vunpack.c.l.b16 %v133
  %v168 = vunpack.c.l.b16 %v134
  %v169 = vpack.c.b16 %v166, %v165
  %v170 = vpack.c.b16 %v168, %v167
  %vm171 = vcmask 261120
  %v173 = vsel %vm171, %v169, 0
  %v176 = vsel %vm171, %v170, 0
  %178 = vmatprep.subr.bf16.mxu0 0
  %179 = vmatpush1.bf16.msra.mxu0 %v135
  %180 = vmatprep.subr.bf16.mxu0 0
  %181 = vmatpush1.bf16.msra.mxu0 %v136
  %182 = vmatprep.subr.bf16.mxu0 0
  %183 = vmatpush1.bf16.msra.mxu0 0
  %184 = vmatprep.subr.bf16.mxu0 0
  %185 = vmatpush1.bf16.msra.mxu0 0
  %186 = vmatprep.subr.bf16.mxu0 0
  %187 = vmatpush1.bf16.msra.mxu0 0
  %188 = vmatprep.subr.bf16.mxu0 0
  %189 = vmatpush1.bf16.msra.mxu0 0
  %190 = vmatprep.subr.bf16.mxu0 0
  %191 = vmatpush1.bf16.msra.mxu0 0
  %192 = vmatprep.subr.bf16.mxu0 0
  %193 = vmatpush1.bf16.msra.mxu0 0
  %194 = vmatprep.subr.bf16.mxu0 0
  %195 = vmatpush1.bf16.msra.mxu0 0
  %196 = vmatprep.subr.bf16.mxu0 0
  %197 = vmatpush1.bf16.msra.mxu0 0
  %198 = vmatprep.subr.bf16.mxu0 0
  %199 = vmatpush1.bf16.msra.mxu0 0
  %200 = vmatprep.subr.bf16.mxu0 0
  %201 = vmatpush1.bf16.msra.mxu0 0
  %202 = vmatprep.subr.bf16.mxu0 0
  %203 = vmatpush1.bf16.msra.mxu0 0
  %204 = vmatprep.subr.bf16.mxu0 0
  %205 = vmatpush1.bf16.msra.mxu0 0
  %206 = vmatprep.subr.bf16.mxu0 0
  %207 = vmatpush1.bf16.msra.mxu0 0
  %208 = vmatprep.subr.bf16.mxu0 0
  %209 = vmatpush1.bf16.msra.mxu0 0
  %210 = vmatprep.mubr.bf16.mxu0 0
  %211 = vmatmul.mubr.bf16.gmra.mrb[0].mxu0 %v173
  %v212 = vpop.f32.mrb[0].mxu0
  %v213 = vadd.f32 %v144, %v212
  %v214 = vpop.f32.mrb[0].mxu0
  %v215 = vpop.f32.mrb[0].mxu0
  %v216 = vadd.f32 %v149, %v215
  %v217 = vpop.f32.mrb[0].mxu0
  %218 = vmatprep.mubr.bf16.mxu0 0
  %219 = vmatmul.mubr.bf16.gmra.mrb[0].mxu0 %v176
  %v220 = vpop.f32.mrb[0].mxu0
  %v221 = vadd.f32 %v154, %v220
  %v222 = vpop.f32.mrb[0].mxu0
  %v223 = vpop.f32.mrb[0].mxu0
  %v224 = vadd.f32 %v159, %v223
  %v225 = vpop.f32.mrb[0].mxu0
  %226 = vdwg.mxu0
  %v227 = vmax.f32 %v213, 0.0
  %v228 = vmax.f32 %v216, 0.0
  %v229 = vmax.f32 %v221, 0.0
  %v230 = vmax.f32 %v224, 0.0
  %v231 = vld [vmem:[%s5] sm:$0x3]
  %v232 = vpack.c.bf16 %v228, %v227
  %v233 = vpack.c.bf16 %v230, %v229
  %v234 = vld [vmem:[%s6] sm:$0xf]
  %236 = vset.pattern.permute.xlu0 0
  %237 = vperm.xlu0 %236, %v234
  %v238 = vpop.permute.xlu0 %237
  %v241 = vsel %vm171, %v231, 0
  %243 = vmatprep.subr.bf16.mxu0 0
  %244 = vmatpush1.bf16.msra.mxu0 %v232
  %245 = vmatprep.subr.bf16.mxu0 0
  %246 = vmatpush1.bf16.msra.mxu0 %v233
  %247 = vmatprep.subr.bf16.mxu0 0
  %248 = vmatpush1.bf16.msra.mxu0 0
  %249 = vmatprep.subr.bf16.mxu0 0
  %250 = vmatpush1.bf16.msra.mxu0 0
  %251 = vmatprep.subr.bf16.mxu0 0
  %252 = vmatpush1.bf16.msra.mxu0 0
  %253 = vmatprep.subr.bf16.mxu0 0
  %254 = vmatpush1.bf16.msra.mxu0 0
  %255 = vmatprep.subr.bf16.mxu0 0
  %256 = vmatpush1.bf16.msra.mxu0 0
  %257 = vmatprep.subr.bf16.mxu0 0
  %258 = vmatpush1.bf16.msra.mxu0 0
  %259 = vmatprep.subr.bf16.mxu0 0
  %260 = vmatpush1.bf16.msra.mxu0 0
  %261 = vmatprep.subr.bf16.mxu0 0
  %262 = vmatpush1.bf16.msra.mxu0 0
  %263 = vmatprep.subr.bf16.mxu0 0
  %264 = vmatpush1.bf16.msra.mxu0 0
  %265 = vmatprep.subr.bf16.mxu0 0
  %266 = vmatpush1.bf16.msra.mxu0 0
  %267 = vmatprep.subr.bf16.mxu0 0
  %268 = vmatpush1.bf16.msra.mxu0 0
  %269 = vmatprep.subr.bf16.mxu0 0
  %270 = vmatpush1.bf16.msra.mxu0 0
  %271 = vmatprep.subr.bf16.mxu0 0
  %272 = vmatpush1.bf16.msra.mxu0 0
  %273 = vmatprep.subr.bf16.mxu0 0
  %274 = vmatpush1.bf16.msra.mxu0 0
  %275 = vmatprep.mubr.bf16.mxu0 0
  %276 = vmatmul.mubr.bf16.gmra.mrb[0].mxu0 %v241
  %v277 = vpop.f32.mrb[0].mxu0
  %v278 = vadd.f32 %v238, %v277
  %v279 = vpop.f32.mrb[0].mxu0
  %v280 = vpop.f32.mrb[0].mxu0
  %v281 = vpop.f32.mrb[0].mxu0
  %282 = vdwg.mxu0
  %v283 = vlaneseq
  %v284 = vshrl.u32 %v283, 7
  %v285 = vmax.f32 %v278, 0.0
  %vm286 = vcmp.ne.f32.partialorder %v278, %v278
  %v287 = vadd.f32 %v278, 0.0
  %v288 = vand.u32 2147483647, %v278
  %v289 = vsub.f32 0.0, %v288
  %v290 = vmul.f32 %v289, 1.442695
  %v291 = vpow.pop %v290
  %v292 = vadd.f32 %v291, 1.0
  %v293 = vlog2.pop %v292
  %v294 = vmul.f32 %v293, 0.6931472
  %v295 = vmul.f32 -0.5, %v291
  %v296 = vadd.f32 %v295, 1.0
  %v297 = vmul.f32 %v296, %v291
  %v298 = vand.u32 2147483647, %v291
  %vm299 = vcmp.lt.f32.partialorder %v298, 0.0004427343
  %v300 = vsel %vm299, %v297, %v294
  %v301 = vadd.f32 %v285, %v300
  %v302 = vsel %vm286, %v287, %v301
  %v303 = vmul.f32 %v302, 0.9
  %v304 = vadd.f32 %v303, 0.1
  %vm305 = vcmp.lt.s32.totalorder %v284, 2
  %v306 = vsel %vm305, %v278, %v304
  %307 = vst [vmem:[%s7] sm:$0xf] %v306
  // Predicated region
  $region30: #{_forward_impl.1} parent=0 // pred_check
    _
  $region31: #{_forward_impl.1} parent=0 // pred_check_branch
    %309 = sbr.rel (0) target = $region33
  $region32: #{_forward_impl.1} parent=0 // pred_region
    _
  $region33: #{_forward_impl.1} parent=0 // pred_fallthru
    _
  // Predicated region
  $region34: #{_forward_impl.1} parent=0 // pred_check
    _
  $region35: #{_forward_impl.1} parent=0 // pred_check_branch
    %311 = sbr.rel (0) target = $region37
  $region36: #{_forward_impl.1} parent=0 // pred_region
    _
  $region37: #{_forward_impl.1} parent=0 // pred_fallthru
    _

</llo_original>
